<compile_context>
chip_gen: v7x
topology: tpu7x:2x2x1
jax: 0.10.0
libtpu: 0.0.40
codegen_flags: <defaults>
</compile_context>

<pallas_src>
import jax
import jax.numpy as jnp
from jax.experimental import pallas as pl
from jax.experimental.pallas import tpu as pltpu

# ---- module config (Conv(c1, c2, k=3, s=1) -> autopad p=1, groups=1, dil=1, act=SiLU) ----
C1, C2 = 4, 8
K = 3
STRIDE = 1
PAD = K // 2          # autopad(3) = 1
BN_EPS = 1e-5
N, H, W = 2, 16, 16   # small synthetic shapes


def conv_bn_silu_kernel(x_ref, w_ref, bias_ref, o_ref):
    """x_ref:    (K*K*Cin, tm)  transposed im2col columns for this tile
       w_ref:    (Cout, K*K*Cin) conv weights with BN scale pre-folded
       bias_ref: (Cout, 1)       folded BatchNorm bias
       o_ref:    (Cout, tm)      lane-dense output tile"""
    # Single MXU push: (Cout, KKC) @ (KKC, tm) with f32 accumulation.
    acc = jnp.dot(w_ref[...], x_ref[...], preferred_element_type=jnp.float32)
    # Fused folded-BN bias + SiLU, all in f32 (VPU/EUP), lane-dense store.
    y = acc + bias_ref[...]
    o_ref[...] = (y * jax.nn.sigmoid(y)).astype(o_ref.dtype)


def conv_forward(x_nchw, w_oihw, gamma, beta, running_mean, running_var,
                 *, tm=256, compute_dtype=jnp.float32):
    n, cin, h, w = x_nchw.shape
    cout = w_oihw.shape[0]
    m = n * h * w
    kkc = K * K * cin

    # ---- layout glue in plain JAX (transposed im2col) ----
    # Pad spatially in NCHW, then build X^T = (K*K*Cin, M) with row index
    # (kh*K + kw)*Cin + ci and column index flattened over (n, h, w).
    x_pad = jnp.pad(x_nchw.astype(jnp.float32),
                    ((0, 0), (0, 0), (PAD, PAD), (PAD, PAD)))
    taps = []
    for kh in range(K):
        for kw in range(K):
            tap = x_pad[:, :, kh:kh + h, kw:kw + w]          # (N, Cin, H, W)
            taps.append(jnp.transpose(tap, (1, 0, 2, 3)).reshape(cin, m))
    x_t = jnp.concatenate(taps, axis=0)                       # (K*K*Cin, M)

    # Weights: (Cout, Cin, K, K) -> (Cout, K, K, Cin) -> (Cout, K*K*Cin),
    # column index = (kh*K + kw)*Cin + ci (matches X^T row order).
    w_mat = jnp.transpose(w_oihw, (0, 2, 3, 1)).reshape(cout, kkc).astype(jnp.float32)

    # Fold eval-mode BatchNorm: scale into the weights, bias stays separate.
    scale = gamma / jnp.sqrt(running_var + BN_EPS)             # (Cout,)
    w_folded = (w_mat * scale[:, None]).astype(compute_dtype)  # (Cout, K*K*Cin)
    bias = (beta - running_mean * scale).reshape(cout, 1).astype(jnp.float32)

    # Pad M up to a multiple of tm (padded columns are sliced off afterwards).
    m_pad = pl.cdiv(m, tm) * tm
    if m_pad != m:
        x_t = jnp.pad(x_t, ((0, 0), (0, m_pad - m)))
    x_t = x_t.astype(compute_dtype)

    in_bytes = x_t.size * x_t.dtype.itemsize + w_folded.size * w_folded.dtype.itemsize \
        + bias.size * 4
    out_bytes = cout * m_pad * 4
    cost = pl.CostEstimate(flops=2 * m_pad * kkc * cout,
                           transcendentals=m_pad * cout,
                           bytes_accessed=in_bytes + out_bytes)

    out_t = pl.pallas_call(
        conv_bn_silu_kernel,
        out_shape=jax.ShapeDtypeStruct((cout, m_pad), jnp.float32),
        grid=(m_pad // tm,),
        in_specs=[
            pl.BlockSpec((kkc, tm), lambda i: (0, i)),    # X^T tile (lane-dense)
            pl.BlockSpec((cout, kkc), lambda i: (0, 0)),  # folded weights (constant)
            pl.BlockSpec((cout, 1), lambda i: (0, 0)),    # folded bias (constant)
        ],
        out_specs=pl.BlockSpec((cout, tm), lambda i: (0, i)),
        compiler_params=pltpu.CompilerParams(dimension_semantics=("parallel",)),
        cost_estimate=cost,
    )(x_t, w_folded, bias)

    # (Cout, M_pad) -> (Cout, M) -> NCHW
    out = out_t[:, :m].reshape(cout, n, h, w)
    return jnp.transpose(out, (1, 0, 2, 3))


def reference_forward(x_nchw, w_oihw, gamma, beta, running_mean, running_var):
    conv = jax.lax.conv_general_dilated(
        x_nchw.astype(jnp.float32), w_oihw.astype(jnp.float32),
        window_strides=(STRIDE, STRIDE), padding=((PAD, PAD), (PAD, PAD)),
        dimension_numbers=("NCHW", "OIHW", "NCHW"))
    inv = gamma / jnp.sqrt(running_var + BN_EPS)
    y = (conv - running_mean[None, :, None, None]) * inv[None, :, None, None] \
        + beta[None, :, None, None]
    return y * jax.nn.sigmoid(y)


if __name__ == "__main__":
    key = jax.random.PRNGKey(0)
    kx, kw, kg, kb, km, kv = jax.random.split(key, 6)

    x = jax.random.normal(kx, (N, C1, H, W), dtype=jnp.float32)
    weight = jax.random.normal(kw, (C2, C1, K, K), dtype=jnp.float32) * 0.1
    gamma = 1.0 + 0.1 * jax.random.normal(kg, (C2,), dtype=jnp.float32)
    beta = 0.1 * jax.random.normal(kb, (C2,), dtype=jnp.float32)
    running_mean = 0.1 * jax.random.normal(km, (C2,), dtype=jnp.float32)
    running_var = jax.random.uniform(kv, (C2,), dtype=jnp.float32, minval=0.5, maxval=1.5)
    # TODO(synk): BatchNorm2d training-mode batch-stat computation/update is not
    # reproduced; this implements the (standard) eval-mode / fused-inference path.
    # On v6e/v7x, pass compute_dtype=jnp.bfloat16 to halve activation/weight HBM
    # traffic (accumulation and epilogue stay f32).

    out = conv_forward(x, weight, gamma, beta, running_mean, running_var)
    out = jax.block_until_ready(out)

    ref = reference_forward(x, weight, gamma, beta, running_mean, running_var)
    assert out.shape == (N, C2, H, W), out.shape
    assert jnp.allclose(out, ref, atol=1e-4, rtol=1e-4), float(jnp.max(jnp.abs(out - ref)))

    print("KERNEL_OK")
</pallas_src>

<mosaic_0001>
module attributes {stable_mosaic.version = 11 : i64} {
  func.func @conv_bn_silu_kernel(%arg0: i32, %arg1: memref<36x256xf32, #tpu.memory_space<vmem>>, %arg2: memref<8x36xf32, #tpu.memory_space<vmem>>, %arg3: memref<8x1xf32, #tpu.memory_space<vmem>>, %arg4: memref<8x256xf32, #tpu.memory_space<vmem>>) attributes {dimension_semantics = [#tpu.dimension_semantics<parallel>], iteration_bounds = array<i64: 2>, scalar_prefetch = 0 : i64, scratch_operands = 0 : i64, tpu.core_type = #tpu.core_type<tc>, window_params = [{transform_indices = @transform_0, window_bounds = array<i64: 36, 256>}, {pipeline_mode = #tpu.pipeline_mode<synchronous>, transform_indices = @transform_1, window_bounds = array<i64: 8, 36>}, {pipeline_mode = #tpu.pipeline_mode<synchronous>, transform_indices = @transform_2, window_bounds = array<i64: 8, 1>}, {transform_indices = @transform_3, window_bounds = array<i64: 8, 256>}]} {
    %c0 = arith.constant 0 : index
    %c0_0 = arith.constant 0 : index
    %0 = vector.load %arg2[%c0, %c0_0] : memref<8x36xf32, #tpu.memory_space<vmem>>, vector<8x36xf32>
    %c0_1 = arith.constant 0 : index
    %c0_2 = arith.constant 0 : index
    %1 = vector.load %arg1[%c0_1, %c0_2] : memref<36x256xf32, #tpu.memory_space<vmem>>, vector<36x256xf32>
    %cst = arith.constant dense<0.000000e+00> : vector<8x256xf32>
    %2 = tpu.matmul %0, %1, %cst {dimension_numbers = #tpu.dot_dimension_numbers<[1], [0], [0], [1], [0, 0, 1, 1], [], []>} : vector<8x36xf32>, vector<36x256xf32>, vector<8x256xf32> -> vector<8x256xf32>
    %c0_3 = arith.constant 0 : index
    %c0_4 = arith.constant 0 : index
    %3 = vector.load %arg3[%c0_3, %c0_4] : memref<8x1xf32, #tpu.memory_space<vmem>>, vector<8x1xf32>
    %4 = vector.broadcast %3 : vector<8x1xf32> to vector<8x256xf32>
    %5 = arith.addf %2, %4 : vector<8x256xf32>
    %6 = arith.negf %5 : vector<8x256xf32>
    %7 = math.exp %6 : vector<8x256xf32>
    %cst_5 = arith.constant 1.000000e+00 : f32
    %8 = vector.broadcast %cst_5 : f32 to vector<8x256xf32>
    %9 = arith.addf %8, %7 : vector<8x256xf32>
    %10 = arith.divf %8, %9 : vector<8x256xf32>
    %11 = arith.mulf %5, %10 : vector<8x256xf32>
    %c0_6 = arith.constant 0 : index
    %c0_7 = arith.constant 0 : index
    %12 = vector.load %arg4[%c0_6, %c0_7] : memref<8x256xf32, #tpu.memory_space<vmem>>, vector<8x256xf32>
    tpu.vector_store %arg4[%c0_6, %c0_7], %11 {strides = array<i32>} : memref<8x256xf32, #tpu.memory_space<vmem>>, vector<8x256xf32>,
    return
  }
  func.func @transform_0(%arg0: i32) -> (i32, i32) {
    %c0_i32 = arith.constant 0 : i32
    %c0_i32_0 = arith.constant 0 : i32
    return %c0_i32, %arg0 : i32, i32
  }
  func.func @transform_1(%arg0: i32) -> (i32, i32) {
    %c0_i32 = arith.constant 0 : i32
    %c0_i32_0 = arith.constant 0 : i32
    %c0_i32_1 = arith.constant 0 : i32
    return %c0_i32, %c0_i32_0 : i32, i32
  }
  func.func @transform_2(%arg0: i32) -> (i32, i32) {
    %c0_i32 = arith.constant 0 : i32
    %c0_i32_0 = arith.constant 0 : i32
    %c0_i32_1 = arith.constant 0 : i32
    return %c0_i32, %c0_i32_0 : i32, i32
  }
  func.func @transform_3(%arg0: i32) -> (i32, i32) {
    %c0_i32 = arith.constant 0 : i32
    %c0_i32_0 = arith.constant 0 : i32
    return %c0_i32, %arg0 : i32, i32
  }
}

</mosaic_0001>

<llo_original>
// kernel: tpu_custom_call.1
$region0: #{tpu_custom_call.1}
  #allocation0 [shape = 'u32[]', space=smem, size = 0x4, offset = 0x4, fixed_abs, tag = 'smem constant byte address 0x4 - core index']
  #allocation1 [shape = 'u32[144,128]{1,0:T(1,128)}', space=vmem, size = 0x12000, scoped, tag = 'internal scratch']
  %s0 = inlined_call_operand.hbm [shape: f32[36,512], index: 0, kind: input, shape index: {}]
  %s1 = inlined_call_operand.vmem [shape: f32[8,36], index: 1, kind: input, shape index: {}]
  %s2 = inlined_call_operand.vmem [shape: f32[8,1], index: 2, kind: input, shape index: {}]
  %s3 = inlined_call_operand.hbm [shape: f32[8,512], index: 3, kind: output, shape index: {}]
  %s4 = sld [smem:[#allocation0]]
  $region49: #{tpu_custom_call.1} parent=0
    _
  %s6 = ssub.s32 1, %s4
  %s7 = scalar_select 0, %s6, %s4
  $region1: #{tpu_custom_call.1} parent=0
    #allocation2 [shape = 'u8[81920]{0}', space=vmem, size = 0x14000, scoped, tag = 'input window, operand 0']
    #allocation3 [shape = 's32[2]{0}', space=sflag, size = 0x8, scoped, tag = 'scoped memory for tpu_custom_call.1']
    #allocation4 [shape = 's32[2]{0}', space=sflag, size = 0x8, scoped, tag = 'scoped memory for tpu_custom_call.1']
    #allocation5 [shape = 'u8[16384]{0}', space=vmem, size = 0x4000, scoped, tag = 'output window, operand 0']
    %8 = vsyncpa [#allocation3], 0
    %s9 = scalar_lea.sflag [#allocation3], 1
    %10 = vsyncpa %s9, 0
    %11 = vsyncpa [#allocation4], 0
    %s12 = scalar_lea.sflag [#allocation4], 1
    %13 = vsyncpa %s12, 0
    loop: start=0, step=1, limit=4
    $region2: #{tpu_custom_call.1} parent=1 // loop_pre_header
      _
    $region3: #{tpu_custom_call.1} parent=1 // loop_header
      %s15 = sphi 0, %s19
      %p16 = scmp.ge.s32.totalorder %s15, 4
      %s25 = sphi 0, %s27
      %s28 = sphi 0, %s25
      %s29 = sphi 0, %s28
      %s45 = sphi 0, %s29
      %s49 = sphi 0, %s49
      %s51 = sphi 0, %s49
      %s52 = sphi 0, %s51
      %s66 = sphi 0, %s52
      %s70 = sphi 0, %s70
      %s72 = sphi 0, %s70
      %s73 = sphi 0, %s72
      %s87 = sphi 0, %s73
      %s93 = sphi 0, %s95
      %s96 = sphi 0, %s93
      %s97 = sphi 0, %s96
      %s113 = sphi 0, %s97
    $region4: #{tpu_custom_call.1} parent=1 // loop_header_branch
      %18 = sbr.rel (%p16) target = $region8
    $region5: #{tpu_custom_call.1} parent=1 // loop_body
      %s20 = ssub.s32 %s15, 1
      %s21 = ssub.s32 %s15, 2
      %s22 = sadd.s32 %s15, 1
      %s23 = ssub.s32 %s15, %s22
      %p24 = scmp.eq.s32.totalorder %s23, 0
      %s26 = sadd.s32 %s25, 1
      %s27 = scalar_select %p24, %s25, %s26
      %p30 = pneg %p24
      %p31 = scmp.eq.s32.totalorder %s15, 1
      %p32 = por %p30, %p31
      %p33 = scmp.ne.s32.totalorder %s25, %s28
      %p34 = scmp.eq.s32.totalorder %s15, 0
      %p35 = por %p33, %p34
      %p36 = scmp.ne.s32.totalorder %s25, %s28
      %p37 = scmp.eq.s32.totalorder %s20, 1
      %p38 = por %p36, %p37
      %p39 = scmp.ne.s32.totalorder %s28, %s29
      %p40 = scmp.eq.s32.totalorder %s20, 0
      %p41 = por %p39, %p40
      %p42 = scmp.ne.s32.totalorder %s28, %s29
      %p43 = scmp.eq.s32.totalorder %s21, 1
      %p44 = por %p42, %p43
      %p46 = scmp.ne.s32.totalorder %s29, %s45
      %p47 = scmp.eq.s32.totalorder %s21, 0
      %p48 = por %p46, %p47
      %s50 = sadd.s32 %s49, 1
      %p53 = scmp.eq.s32.totalorder %s15, 1
      %p54 = scmp.ne.s32.totalorder %s49, %s51
      %p55 = scmp.eq.s32.totalorder %s15, 0
      %p56 = por %p54, %p55
      %p57 = scmp.ne.s32.totalorder %s49, %s51
      %p58 = scmp.eq.s32.totalorder %s20, 1
      %p59 = por %p57, %p58
      %p60 = scmp.ne.s32.totalorder %s51, %s52
      %p61 = scmp.eq.s32.totalorder %s20, 0
      %p62 = por %p60, %p61
      %p63 = scmp.ne.s32.totalorder %s51, %s52
      %p64 = scmp.eq.s32.totalorder %s21, 1
      %p65 = por %p63, %p64
      %p67 = scmp.ne.s32.totalorder %s52, %s66
      %p68 = scmp.eq.s32.totalorder %s21, 0
      %p69 = por %p67, %p68
      %s71 = sadd.s32 %s70, 1
      %p74 = scmp.eq.s32.totalorder %s15, 1
      %p75 = scmp.ne.s32.totalorder %s70, %s72
      %p76 = scmp.eq.s32.totalorder %s15, 0
      %p77 = por %p75, %p76
      %p78 = scmp.ne.s32.totalorder %s70, %s72
      %p79 = scmp.eq.s32.totalorder %s20, 1
      %p80 = por %p78, %p79
      %p81 = scmp.ne.s32.totalorder %s72, %s73
      %p82 = scmp.eq.s32.totalorder %s20, 0
      %p83 = por %p81, %p82
      %p84 = scmp.ne.s32.totalorder %s72, %s73
      %p85 = scmp.eq.s32.totalorder %s21, 1
      %p86 = por %p84, %p85
      %p88 = scmp.ne.s32.totalorder %s73, %s87
      %p89 = scmp.eq.s32.totalorder %s21, 0
      %p90 = por %p88, %p89
      %s91 = ssub.s32 %s15, %s22
      %p92 = scmp.eq.s32.totalorder %s91, 0
      %s94 = sadd.s32 %s93, 1
      %s95 = scalar_select %p92, %s93, %s94
      %p98 = pneg %p92
      %p99 = scmp.eq.s32.totalorder %s15, 1
      %p100 = por %p98, %p99
      %p101 = scmp.ne.s32.totalorder %s93, %s96
      %p102 = scmp.eq.s32.totalorder %s15, 0
      %p103 = por %p101, %p102
      %p104 = scmp.ne.s32.totalorder %s93, %s96
      %p105 = scmp.eq.s32.totalorder %s20, 1
      %p106 = por %p104, %p105
      %p107 = scmp.ne.s32.totalorder %s96, %s97
      %p108 = scmp.eq.s32.totalorder %s20, 0
      %p109 = por %p107, %p108
      %p110 = scmp.ne.s32.totalorder %s96, %s97
      %p111 = scmp.eq.s32.totalorder %s21, 1
      %p112 = por %p110, %p111
      %p114 = scmp.ne.s32.totalorder %s97, %s113
      %p115 = scmp.eq.s32.totalorder %s21, 0
      %p116 = por %p114, %p115
      %p117 = scmp.le.s32.totalorder 1, %s15
      %p118 = scmp.lt.s32.totalorder %s15, 3
      %p119 = pnand %p117, %p118
      %p120 = pneg %p119
      // Predicated region
      $region9: #{tpu_custom_call.1} parent=5 // pred_check
        _
      $region10: #{tpu_custom_call.1} parent=5 // pred_check_branch
        %122 = sbr.rel (%p119) target = $region12
      $region11: #{tpu_custom_call.1} parent=5 // pred_region
        %s123 = ssub.s32 %s15, 1
        // Predicated region
        $region13: #{tpu_custom_call.1} parent=11 // pred_check
          %p124 = pneg %p62
        $region14: #{tpu_custom_call.1} parent=11 // pred_check_branch
          %126 = sbr.rel (%p124) target = $region16
        $region15: #{tpu_custom_call.1} parent=11 // pred_region
          _
        $region16: #{tpu_custom_call.1} parent=11 // pred_fallthru
          _
        // Predicated region
        $region17: #{tpu_custom_call.1} parent=11 // pred_check
          %p127 = pneg %p83
        $region18: #{tpu_custom_call.1} parent=11 // pred_check_branch
          %129 = sbr.rel (%p127) target = $region20
        $region19: #{tpu_custom_call.1} parent=11 // pred_region
          _
        $region20: #{tpu_custom_call.1} parent=11 // pred_fallthru
          _
      $region12: #{tpu_custom_call.1} parent=5 // pred_fallthru
        _
      %p130 = scmp.lt.s32.totalorder %s15, 2
      // Predicated region
      $region21: #{tpu_custom_call.1} parent=5 // pred_check
        %p131 = pneg %p130
      $region22: #{tpu_custom_call.1} parent=5 // pred_check_branch
        %133 = sbr.rel (%p131) target = $region24
      $region23: #{tpu_custom_call.1} parent=5 // pred_region
        // Predicated region
        $region25: #{tpu_custom_call.1} parent=23 // pred_check
          %p134 = pneg %p35
        $region26: #{tpu_custom_call.1} parent=23 // pred_check_branch
          %136 = sbr.rel (%p134) target = $region28
        $region27: #{tpu_custom_call.1} parent=23 // pred_region
          %s137 = sand.u32 %s25, 1
          %s138 = scalar_lea.sflag [#allocation3], %s137
          %s139 = sand.u32 %s25, 1
          %s140 = smul.addr %s139, 80
          %s141 = scalar_lea.vmem [#allocation2], %s140
          %s142 = smul.u32 2, %s15
          %s144 = ssub.s32 1280, 1280
          %145 = vsyncadd %s138, %s144
          %s146 = smul.addr %s142, 128
          %s147 = scalar_lea.hbm %s0, %s146
          %s148 = sshll.u32 %s141, 4
          %s149 = int_to_ptr.vmem [resolvable:$true] %s148
          %154 = dma.hbm_to_vmem [thread:$0]  %s147, 1280, %s149, %s138, 512, 256, 16
        $region28: #{tpu_custom_call.1} parent=23 // pred_fallthru
          _
      $region24: #{tpu_custom_call.1} parent=5 // pred_fallthru
        _
      %p155 = scmp.le.s32.totalorder 1, %s15
      %p156 = scmp.lt.s32.totalorder %s15, 3
      %p157 = pnand %p155, %p156
      %p158 = pneg %p157
      // Predicated region
      $region29: #{tpu_custom_call.1} parent=5 // pred_check
        _
      $region30: #{tpu_custom_call.1} parent=5 // pred_check_branch
        %160 = sbr.rel (%p157) target = $region32
      $region31: #{tpu_custom_call.1} parent=5 // pred_region
        %s161 = ssub.s32 %s15, 1
        %s162 = sand.u32 %s28, 1
        %s163 = scalar_lea.sflag [#allocation3], %s162
        %s164 = sand.u32 %s28, 1
        %s165 = smul.addr %s164, 80
        %s166 = scalar_lea.vmem [#allocation2], %s165
        // Predicated region
        $region33: #{tpu_custom_call.1} parent=31 // pred_check
          %p167 = pneg %p41
        $region34: #{tpu_custom_call.1} parent=31 // pred_check_branch
          %169 = sbr.rel (%p167) target = $region36
        $region35: #{tpu_custom_call.1} parent=31 // pred_region
          %170 = dma.done %s163, 1280
        $region36: #{tpu_custom_call.1} parent=31 // pred_fallthru
          _
        %s171 = sand.u32 %s28, 1
        %s172 = scalar_lea.sflag [#allocation3], %s171
        %s173 = sand.u32 %s28, 1
        %s174 = smul.addr %s173, 80
        %s175 = scalar_lea.vmem [#allocation2], %s174
        %p176 = pneg %p41
        %p177 = pneg %p38
        %p178 = pneg %p62
        %p179 = pneg %p59
        %p180 = pneg %p83
        %p181 = pneg %p80
        %p182 = pneg %p109
        %p183 = pneg %p106
        %s184 = sand.u32 %s96, 1
        %s185 = scalar_lea.sflag [#allocation4], %s184
        %s186 = sand.u32 %s96, 1
        %s187 = smul.addr %s186, 16
        %s188 = scalar_lea.vmem [#allocation5], %s187
        %s189 = smul.u32 2, %s20
        %s190 = smul.u32 2, %s20
        %v191 = vld [vmem:[%s1] sm:$0xff]
        %v192 = vld [vmem:[%s166] sm:$0xff]
        %v193 = vld [vmem:[%s166 + $0x8] sm:$0xff]
        %v194 = vld [vmem:[%s166 + $0x10] sm:$0xff]
        %v195 = vld [vmem:[%s166 + $0x18] sm:$0xff]
        %v196 = vld [vmem:[%s166 + $0x20] sm:$0xff]
        %v197 = vld [vmem:[%s166 + $0x28] sm:$0xff]
        %v198 = vld [vmem:[%s166 + $0x30] sm:$0xff]
        %v199 = vld [vmem:[%s166 + $0x38] sm:$0xff]
        %v200 = vld [vmem:[%s166 + $0x40] sm:$0xf]
        %v201 = vld [vmem:[%s166 + $0x48] sm:$0xf]
        %v202 = vld [vmem:[%s2] sm:$0xff]
        %204 = vset.pattern.permute.xlu0 0
        %205 = vperm.xlu0 %204, %v202
        %v206 = vpop.permute.xlu0 %205
        %vm208 = vcmask 293888
        %v210 = vsel %vm208, %v191, 0
        %vm212 = vcmask 1043456
        %v214 = vsel %vm212, %v200, 0
        %v217 = vsel %vm212, %v201, 0
        %219 = vmatprep.subr.mxu0 %v193
        %220 = vmatpush1.msra.mxu0 %v192
        %221 = vmatprep.subr.mxu0 %v195
        %222 = vmatpush1.msra.mxu0 %v194
        %223 = vmatprep.subr.mxu0 %v197
        %224 = vmatpush1.msra.mxu0 %v196
        %225 = vmatprep.subr.mxu0 %v199
        %226 = vmatpush1.msra.mxu0 %v198
        %227 = vmatprep.subr.mxu0 %v217
        %228 = vmatpush1.msra.mxu0 %v214
        %229 = vmatprep.subr.mxu0 0.0
        %230 = vmatpush1.msra.mxu0 0.0
        %231 = vmatprep.subr.mxu0 0.0
        %232 = vmatpush1.msra.mxu0 0.0
        %233 = vmatprep.subr.mxu0 0.0
        %234 = vmatpush1.msra.mxu0 0.0
        %235 = vmatprep.subr.mxu0 0.0
        %236 = vmatpush1.msra.mxu0 0.0
        %237 = vmatprep.subr.mxu0 0.0
        %238 = vmatpush1.msra.mxu0 0.0
        %239 = vmatprep.subr.mxu0 0.0
        %240 = vmatpush1.msra.mxu0 0.0
        %241 = vmatprep.subr.mxu0 0.0
        %242 = vmatpush1.msra.mxu0 0.0
        %243 = vmatprep.subr.mxu0 0.0
        %244 = vmatpush1.msra.mxu0 0.0
        %245 = vmatprep.subr.mxu0 0.0
        %246 = vmatpush1.msra.mxu0 0.0
        %247 = vmatprep.subr.mxu0 0.0
        %248 = vmatpush1.msra.mxu0 0.0
        %249 = vmatprep.subr.mxu0 0.0
        %250 = vmatpush1.msra.mxu0 0.0
        %251 = vmatprep.subr.mxu0 0.0
        %252 = vmatpush1.msra.mxu0 0.0
        %253 = vmatprep.subr.mxu0 0.0
        %254 = vmatpush1.msra.mxu0 0.0
        %255 = vmatprep.subr.mxu0 0.0
        %256 = vmatpush1.msra.mxu0 0.0
        %257 = vmatprep.subr.mxu0 0.0
        %258 = vmatpush1.msra.mxu0 0.0
        %259 = vmatprep.subr.mxu0 0.0
        %260 = vmatpush1.msra.mxu0 0.0
        %261 = vmatprep.subr.mxu0 0.0
        %262 = vmatpush1.msra.mxu0 0.0
        %263 = vmatprep.subr.mxu0 0.0
        %264 = vmatpush1.msra.mxu0 0.0
        %265 = vmatprep.subr.mxu0 0.0
        %266 = vmatpush1.msra.mxu0 0.0
        %267 = vmatprep.subr.mxu0 0.0
        %268 = vmatpush1.msra.mxu0 0.0
        %269 = vmatprep.subr.mxu0 0.0
        %270 = vmatpush1.msra.mxu0 0.0
        %271 = vmatprep.subr.mxu0 0.0
        %272 = vmatpush1.msra.mxu0 0.0
        %273 = vmatprep.subr.mxu0 0.0
        %274 = vmatpush1.msra.mxu0 0.0
        %275 = vmatprep.subr.mxu0 0.0
        %276 = vmatpush1.msra.mxu0 0.0
        %277 = vmatprep.subr.mxu0 0.0
        %278 = vmatpush1.msra.mxu0 0.0
        %279 = vmatprep.subr.mxu0 0.0
        %280 = vmatpush1.msra.mxu0 0.0
        %281 = vmatprep.subr.mxu0 0.0
        %282 = vmatpush1.msra.mxu0 0.0
        %283 = vmatprep.mubr.f32.mxu0 0.0
        %284 = vmatmul.mubr.f32.gmra.mrb[0].mxu0 %v210
        %v285 = vpop.f32.mrb[0].mxu0
        %v286 = vadd.f32 %v206, %v285
        %v287 = vpop.f32.mrb[0].mxu0
        %v288 = vadd.f32 %v206, %v287
        %289 = vdwg.mxu0
        %v290 = vxor.u32 %v286, 2147483648
        %v291 = vxor.u32 %v288, 2147483648
        %v292 = vmul.f32 %v290, 1.442695
        %v293 = vpow.pop %v292
        %v294 = vmul.f32 %v291, 1.442695
        %v295 = vpow.pop %v294
        %v296 = vadd.f32 %v293, 1.0
        %v297 = vadd.f32 %v295, 1.0
        %v298 = vrcp.pop %v296
        %v299 = vmul.f32 1.0, %v298
        %v300 = vrcp.pop %v297
        %v301 = vmul.f32 1.0, %v300
        %v302 = vmul.f32 %v286, %v299
        %v303 = vmul.f32 %v288, %v301
        %304 = vst [vmem:[%s188] sm:$0xff] %v302
        %305 = vst [vmem:[%s188 + $0x8] sm:$0xff] %v303
        %s306 = sand.u32 %s96, 1
        %s307 = scalar_lea.sflag [#allocation4], %s306
        %s308 = sand.u32 %s96, 1
        %s309 = smul.addr %s308, 16
        %s310 = scalar_lea.vmem [#allocation5], %s309
        // Predicated region
        $region37: #{tpu_custom_call.1} parent=31 // pred_check
          %p311 = pneg %p106
        $region38: #{tpu_custom_call.1} parent=31 // pred_check_branch
          %313 = sbr.rel (%p311) target = $region40
        $region39: #{tpu_custom_call.1} parent=31 // pred_region
          %s314 = smul.u32 2, %s20
          %s316 = ssub.s32 256, 256
          %317 = vsyncadd %s307, %s316
          %s318 = smul.addr %s314, 128
          %s319 = scalar_lea.hbm %s3, %s318
          %s321 = sshll.u32 %s310, 4
          %s322 = int_to_ptr.vmem [resolvable:$true] %s321
          %324 = dma.vmem_to_hbm [thread:$0]  %s322, 256, %s319, %s307
        $region40: #{tpu_custom_call.1} parent=31 // pred_fallthru
          _
      $region32: #{tpu_custom_call.1} parent=5 // pred_fallthru
        _
      %p325 = scmp.le.s32.totalorder 2, %s15
      // Predicated region
      $region41: #{tpu_custom_call.1} parent=5 // pred_check
        %p326 = pneg %p325
      $region42: #{tpu_custom_call.1} parent=5 // pred_check_branch
        %328 = sbr.rel (%p326) target = $region44
      $region43: #{tpu_custom_call.1} parent=5 // pred_region
        %s329 = ssub.s32 %s15, 2
        // Predicated region
        $region45: #{tpu_custom_call.1} parent=43 // pred_check
          %p330 = pneg %p112
        $region46: #{tpu_custom_call.1} parent=43 // pred_check_branch
          %332 = sbr.rel (%p330) target = $region48
        $region47: #{tpu_custom_call.1} parent=43 // pred_region
          %s333 = sand.u32 %s97, 1
          %s334 = scalar_lea.sflag [#allocation4], %s333
          %s335 = sand.u32 %s97, 1
          %s336 = smul.addr %s335, 16
          %s337 = scalar_lea.vmem [#allocation5], %s336
          %338 = dma.done %s334, 256
        $region48: #{tpu_custom_call.1} parent=43 // pred_fallthru
          _
      $region44: #{tpu_custom_call.1} parent=5 // pred_fallthru
        _
    $region6: #{tpu_custom_call.1} parent=1 // loop_footer
      %s19 = sadd.s32 1, %s15
    $region7: #{tpu_custom_call.1} parent=1 // loop_footer_branch
      %14 = sbr.rel target = $region3
    $region8: #{tpu_custom_call.1} parent=1 // loop_exit
      _
    %339 = vsyncpa [#allocation3], 1
    %s340 = scalar_lea.sflag [#allocation3], 1
    %341 = vsyncpa %s340, 1
    %342 = vsyncpa [#allocation4], 1
    %s343 = scalar_lea.sflag [#allocation4], 1
    %344 = vsyncpa %s343, 1

</llo_original>
